<compile_context>
chip_gen: v5e
topology: v5e:2x2
jax: 0.10.0
libtpu: 0.0.40
codegen_flags: <defaults>
</compile_context>

<pallas_src>
import functools

import jax
import jax.numpy as jnp
from jax.experimental import pallas as pl
from jax.experimental.pallas import tpu as pltpu


def _round_up(x, m):
    return ((x + m - 1) // m) * m


def stem_kernel(p_ref, w1_ref, w2_ref, b_ref, o_ref, *, wo, m_out, cin):
    # p_ref : [1, 6*cin, M_in]   six stride-2 phase planes, flat spatial on lanes
    # w1_ref: [out_c, 6*cin]     BN-folded weights for taps kh in {0, 1}
    # w2_ref: [out_c, 3*cin]     BN-folded weights for taps kh == 2
    # b_ref : [out_c, 1]         folded BN bias
    # o_ref : [1, out_c, M_out]  lane-dense output tile (flat Ho*Wo padded to 128)
    x01 = p_ref[0, :, :m_out]                        # un-shifted planes (kh = 0, 1)
    x2 = p_ref[0, 0:3 * cin, wo:wo + m_out]          # pr==0 planes shifted by one row (kh = 2)
    acc = jnp.dot(w1_ref[...], x01, preferred_element_type=jnp.float32)
    acc = acc + jnp.dot(w2_ref[...], x2, preferred_element_type=jnp.float32)
    y = acc + b_ref[...]                             # folded BN bias (broadcast over lanes)
    o_ref[0] = jnp.maximum(y, 0.0).astype(o_ref.dtype)   # ReLU


def stem_forward(x_nchw, conv_w, bn_gamma, bn_beta, bn_mean, bn_var,
                 eps=1e-5, compute_dtype=jnp.bfloat16, out_dtype=None):
    """x_nchw: [N, 3, H, W].  conv_w: [out_c, 3, 3, 3] (PyTorch OIHW layout)."""
    N, Cin, H, W = x_nchw.shape
    out_c = conv_w.shape[0]
    Ho = (H - 1) // 2 + 1                  # stride=2, pad=1, k=3
    Wo = (W - 1) // 2 + 1
    m = Ho * Wo
    m_out = _round_up(m, 128)              # lane-dense output length
    m_in = _round_up(m_out + Wo, 128)      # planes get one extra row of slack for kh==2

    out_dtype = x_nchw.dtype if out_dtype is None else out_dtype

    # ---- prologue: pure XLA data movement, ~1.5x the input instead of 9x im2col.
    xq = x_nchw.astype(compute_dtype)
    xp = jnp.pad(xq, ((0, 0), (0, 0), (1, 2), (1, 2)))          # conv pad + 1 row/col of slack
    planes = [xp[:, :, pr:pr + 2 * Ho + 1:2, kw:kw + 2 * Wo:2]  # each [N, Cin, Ho+1, Wo]
              for pr in (0, 1) for kw in (0, 1, 2)]
    planes = jnp.stack(planes, axis=1)                          # [N, 6, Cin, Ho+1, Wo]
    planes = planes.reshape(N, 6 * Cin, (Ho + 1) * Wo)
    planes = jnp.pad(planes, ((0, 0), (0, 0), (0, m_in - (Ho + 1) * Wo)))

    # ---- fold BN into the conv weight (scale) and a per-channel bias.
    scale = bn_gamma / jnp.sqrt(bn_var + eps)                              # [C]
    w = conv_w.astype(jnp.float32) * scale[:, None, None, None]            # [C, Cin, 3, 3]
    # W1 columns ordered (kh in {0,1}, kw, ci) -- matches the plane stacking order.
    w1 = jnp.transpose(w[:, :, 0:2, :], (0, 2, 3, 1)).reshape(out_c, 6 * Cin)
    # W2 columns ordered (kw, ci) -- the kh==2 taps reuse the pr==0 planes, shifted by Wo.
    w2 = jnp.transpose(w[:, :, 2, :], (0, 2, 1)).reshape(out_c, 3 * Cin)
    w1 = w1.astype(compute_dtype)
    w2 = w2.astype(compute_dtype)
    bias = (bn_beta - bn_mean * scale).reshape(out_c, 1).astype(jnp.float32)

    in_item = jnp.dtype(compute_dtype).itemsize
    out_item = jnp.dtype(out_dtype).itemsize
    cost = pl.CostEstimate(
        flops=2 * N * m * out_c * 9 * Cin,
        transcendentals=0,
        bytes_accessed=int(N * 6 * Cin * m_in * in_item            # phase planes
                           + out_c * 9 * Cin * in_item + out_c * 4  # weights + bias
                           + N * out_c * m_out * out_item))         # output

    kernel = functools.partial(stem_kernel, wo=Wo, m_out=m_out, cin=Cin)
    out_padded = pl.pallas_call(
        kernel,
        out_shape=jax.ShapeDtypeStruct((N, out_c, m_out), out_dtype),
        grid=(N,),
        in_specs=[
            pl.BlockSpec((1, 6 * Cin, m_in), lambda n: (n, 0, 0)),   # planes (per image)
            pl.BlockSpec((out_c, 6 * Cin), lambda n: (0, 0)),        # W1 (resident)
            pl.BlockSpec((out_c, 3 * Cin), lambda n: (0, 0)),        # W2 (resident)
            pl.BlockSpec((out_c, 1), lambda n: (0, 0)),              # bias (resident)
        ],
        out_specs=pl.BlockSpec((1, out_c, m_out), lambda n: (n, 0, 0)),
        compiler_params=pltpu.CompilerParams(
            dimension_semantics=("parallel",),
            vmem_limit_bytes=32 * 1024 * 1024),
        cost_estimate=cost,
    )(planes, w1, w2, bias)

    # [N, C, Ho*Wo] -> NCHW (no transpose; at 224^2 the slice is a no-op).
    return out_padded[:, :, :m].reshape(N, out_c, Ho, Wo)


def _reference(x_nchw, conv_w, bn_gamma, bn_beta, bn_mean, bn_var, eps=1e-5):
    y = jax.lax.conv_general_dilated(
        x_nchw, conv_w, window_strides=(2, 2), padding=((1, 1), (1, 1)),
        dimension_numbers=("NCHW", "OIHW", "NCHW"),
        precision=jax.lax.Precision.HIGHEST)
    scale = bn_gamma / jnp.sqrt(bn_var + eps)
    bias = bn_beta - bn_mean * scale
    y = y * scale[None, :, None, None] + bias[None, :, None, None]
    return jnp.maximum(y, 0.0)


if __name__ == "__main__":
    key = jax.random.PRNGKey(0)
    k_x, k_w, k_g, k_b, k_m, k_v = jax.random.split(key, 6)

    N, Cin, H, W = 2, 3, 16, 16
    out_c = 16

    x = jax.random.normal(k_x, (N, Cin, H, W), dtype=jnp.float32)
    # deterministic synthetic parameters (shapes match nn.Conv2d / nn.BatchNorm2d)
    conv_w = jax.random.normal(k_w, (out_c, Cin, 3, 3), dtype=jnp.float32) * 0.1
    bn_gamma = 1.0 + 0.1 * jax.random.normal(k_g, (out_c,), dtype=jnp.float32)
    bn_beta = 0.1 * jax.random.normal(k_b, (out_c,), dtype=jnp.float32)
    bn_mean = 0.1 * jax.random.normal(k_m, (out_c,), dtype=jnp.float32)
    bn_var = jnp.abs(1.0 + 0.1 * jax.random.normal(k_v, (out_c,), dtype=jnp.float32))

    out = stem_forward(x, conv_w, bn_gamma, bn_beta, bn_mean, bn_var)  # bf16 compute, f32 out
    out = jax.block_until_ready(out)

    ref = _reference(x, conv_w, bn_gamma, bn_beta, bn_mean, bn_var)
    assert out.shape == (N, out_c, H // 2, W // 2), out.shape
    err = float(jnp.max(jnp.abs(out - ref)))
    # bf16 inputs/weights with f32 MXU accumulation: error bounded by input rounding.
    assert jnp.allclose(out, ref, atol=3e-2, rtol=3e-2), err

    print("KERNEL_OK")
</pallas_src>

<mosaic_0001>
module attributes {stable_mosaic.version = 11 : i64} {
  func.func @stem_kernel(%arg0: i32, %arg1: memref<1x18x256xbf16, #tpu.memory_space<vmem>>, %arg2: memref<16x18xbf16, #tpu.memory_space<vmem>>, %arg3: memref<16x9xbf16, #tpu.memory_space<vmem>>, %arg4: memref<16x1xf32, #tpu.memory_space<vmem>>, %arg5: memref<1x16x128xf32, #tpu.memory_space<vmem>>) attributes {dimension_semantics = [#tpu.dimension_semantics<parallel>], iteration_bounds = array<i64: 2>, scalar_prefetch = 0 : i64, scratch_operands = 0 : i64, tpu.core_type = #tpu.core_type<tc>, window_params = [{transform_indices = @transform_0, window_bounds = array<i64: 1, 18, 256>}, {pipeline_mode = #tpu.pipeline_mode<synchronous>, transform_indices = @transform_1, window_bounds = array<i64: 16, 18>}, {pipeline_mode = #tpu.pipeline_mode<synchronous>, transform_indices = @transform_2, window_bounds = array<i64: 16, 9>}, {pipeline_mode = #tpu.pipeline_mode<synchronous>, transform_indices = @transform_3, window_bounds = array<i64: 16, 1>}, {transform_indices = @transform_4, window_bounds = array<i64: 1, 16, 128>}]} {
    %c0 = arith.constant 0 : index
    %c0_0 = arith.constant 0 : index
    %c0_1 = arith.constant 0 : index
    %0 = vector.load %arg1[%c0, %c0_0, %c0_1] : memref<1x18x256xbf16, #tpu.memory_space<vmem>>, vector<1x18x128xbf16>
    %1 = vector.shape_cast %0 : vector<1x18x128xbf16> to vector<18x128xbf16>
    %c0_2 = arith.constant 0 : index
    %c0_3 = arith.constant 0 : index
    %c8 = arith.constant 8 : index
    %2 = vector.load %arg1[%c0_2, %c0_3, %c8] : memref<1x18x256xbf16, #tpu.memory_space<vmem>>, vector<1x9x128xbf16>
    %3 = vector.shape_cast %2 : vector<1x9x128xbf16> to vector<9x128xbf16>
    %c0_4 = arith.constant 0 : index
    %c0_5 = arith.constant 0 : index
    %4 = vector.load %arg2[%c0_4, %c0_5] : memref<16x18xbf16, #tpu.memory_space<vmem>>, vector<16x18xbf16>
    %cst = arith.constant dense<0.000000e+00> : vector<16x128xf32>
    %5 = tpu.matmul %4, %1, %cst {dimension_numbers = #tpu.dot_dimension_numbers<[1], [0], [0], [1], [0, 0, 1, 1], [], []>} : vector<16x18xbf16>, vector<18x128xbf16>, vector<16x128xf32> -> vector<16x128xf32>
    %c0_6 = arith.constant 0 : index
    %c0_7 = arith.constant 0 : index
    %6 = vector.load %arg3[%c0_6, %c0_7] : memref<16x9xbf16, #tpu.memory_space<vmem>>, vector<16x9xbf16>
    %cst_8 = arith.constant dense<0.000000e+00> : vector<16x128xf32>
    %7 = tpu.matmul %6, %3, %cst_8 {dimension_numbers = #tpu.dot_dimension_numbers<[1], [0], [0], [1], [0, 0, 1, 1], [], []>} : vector<16x9xbf16>, vector<9x128xbf16>, vector<16x128xf32> -> vector<16x128xf32>
    %8 = arith.addf %5, %7 : vector<16x128xf32>
    %c0_9 = arith.constant 0 : index
    %c0_10 = arith.constant 0 : index
    %9 = vector.load %arg4[%c0_9, %c0_10] : memref<16x1xf32, #tpu.memory_space<vmem>>, vector<16x1xf32>
    %10 = vector.broadcast %9 : vector<16x1xf32> to vector<16x128xf32>
    %11 = arith.addf %8, %10 : vector<16x128xf32>
    %cst_11 = arith.constant 0.000000e+00 : f32
    %12 = vector.broadcast %cst_11 : f32 to vector<16x128xf32>
    %13 = arith.maximumf %11, %12 : vector<16x128xf32>
    %c0_12 = arith.constant 0 : index
    %c0_13 = arith.constant 0 : index
    %c0_14 = arith.constant 0 : index
    %14 = vector.load %arg5[%c0_12, %c0_13, %c0_14] : memref<1x16x128xf32, #tpu.memory_space<vmem>>, vector<1x16x128xf32>
    %15 = vector.shape_cast %14 : vector<1x16x128xf32> to vector<16x128xf32>
    %16 = vector.shape_cast %13 : vector<16x128xf32> to vector<1x16x128xf32>
    tpu.vector_store %arg5[%c0_12, %c0_13, %c0_14], %16 {strides = array<i32>} : memref<1x16x128xf32, #tpu.memory_space<vmem>>, vector<1x16x128xf32>,
    return
  }
  func.func @transform_0(%arg0: i32) -> (i32, i32, i32) {
    %c0_i32 = arith.constant 0 : i32
    %c0_i32_0 = arith.constant 0 : i32
    %c0_i32_1 = arith.constant 0 : i32
    return %arg0, %c0_i32, %c0_i32_0 : i32, i32, i32
  }
  func.func @transform_1(%arg0: i32) -> (i32, i32) {
    %c0_i32 = arith.constant 0 : i32
    %c0_i32_0 = arith.constant 0 : i32
    %c0_i32_1 = arith.constant 0 : i32
    return %c0_i32, %c0_i32_0 : i32, i32
  }
  func.func @transform_2(%arg0: i32) -> (i32, i32) {
    %c0_i32 = arith.constant 0 : i32
    %c0_i32_0 = arith.constant 0 : i32
    %c0_i32_1 = arith.constant 0 : i32
    return %c0_i32, %c0_i32_0 : i32, i32
  }
  func.func @transform_3(%arg0: i32) -> (i32, i32) {
    %c0_i32 = arith.constant 0 : i32
    %c0_i32_0 = arith.constant 0 : i32
    %c0_i32_1 = arith.constant 0 : i32
    return %c0_i32, %c0_i32_0 : i32, i32
  }
  func.func @transform_4(%arg0: i32) -> (i32, i32, i32) {
    %c0_i32 = arith.constant 0 : i32
    %c0_i32_0 = arith.constant 0 : i32
    %c0_i32_1 = arith.constant 0 : i32
    return %arg0, %c0_i32, %c0_i32_0 : i32, i32, i32
  }
}

</mosaic_0001>

<llo_original>
// kernel: tpu_custom_call.1
$region0: #{tpu_custom_call.1}
  #allocation0 [shape = 'u32[]', space=smem, size = 0x4, offset = 0x4, fixed_abs, tag = 'smem constant byte address 0x4 - core index']
  #allocation1 [shape = 'u32[72,128]{1,0:T(1,128)}', space=vmem, size = 0x9000, scoped, tag = 'internal scratch']
  %s0 = inlined_call_operand.vmem [shape: bf16[2,18,256], index: 0, kind: input, shape index: {}]
  %s1 = inlined_call_operand.vmem [shape: bf16[16,18], index: 1, kind: input, shape index: {}]
  %s2 = inlined_call_operand.vmem [shape: bf16[16,9], index: 2, kind: input, shape index: {}]
  %s3 = inlined_call_operand.vmem [shape: f32[16,1], index: 3, kind: input, shape index: {}]
  %s4 = inlined_call_operand.hbm [shape: f32[2,16,128], index: 4, kind: output, shape index: {}]
  %s5 = sld [smem:[#allocation0]]
  $region49: #{tpu_custom_call.1} parent=0
    _
  %s7 = ssub.s32 1, %s5
  %s8 = scalar_select 0, %s7, %s5
  $region1: #{tpu_custom_call.1} parent=0
    #allocation2 [shape = 'u8[16384]{0}', space=vmem, size = 0x4000, scoped, tag = 'output window, operand 0']
    #allocation3 [shape = 's32[2]{0}', space=sflag, size = 0x8, scoped, tag = 'scoped memory for tpu_custom_call.1']
    %9 = vsyncpa [#allocation3], 0
    %s10 = scalar_lea.sflag [#allocation3], 1
    %11 = vsyncpa %s10, 0
    loop: start=0, step=1, limit=4
    $region2: #{tpu_custom_call.1} parent=1 // loop_pre_header
      _
    $region3: #{tpu_custom_call.1} parent=1 // loop_header
      %s13 = sphi 0, %s17
      %p14 = scmp.ge.s32.totalorder %s13, 4
      %s23 = sphi 0, %s25
      %s26 = sphi 0, %s23
      %s27 = sphi 0, %s26
      %s43 = sphi 0, %s27
      %s47 = sphi 0, %s47
      %s49 = sphi 0, %s47
      %s50 = sphi 0, %s49
      %s64 = sphi 0, %s50
      %s68 = sphi 0, %s68
      %s70 = sphi 0, %s68
      %s71 = sphi 0, %s70
      %s85 = sphi 0, %s71
      %s89 = sphi 0, %s89
      %s91 = sphi 0, %s89
      %s92 = sphi 0, %s91
      %s106 = sphi 0, %s92
      %s112 = sphi 0, %s114
      %s115 = sphi 0, %s112
      %s116 = sphi 0, %s115
      %s132 = sphi 0, %s116
    $region4: #{tpu_custom_call.1} parent=1 // loop_header_branch
      %16 = sbr.rel (%p14) target = $region8
    $region5: #{tpu_custom_call.1} parent=1 // loop_body
      %s18 = ssub.s32 %s13, 1
      %s19 = ssub.s32 %s13, 2
      %s20 = sadd.s32 %s13, 1
      %s21 = ssub.s32 %s13, %s20
      %p22 = scmp.eq.s32.totalorder %s21, 0
      %s24 = sadd.s32 %s23, 1
      %s25 = scalar_select %p22, %s23, %s24
      %p28 = pneg %p22
      %p29 = scmp.eq.s32.totalorder %s13, 1
      %p30 = por %p28, %p29
      %p31 = scmp.ne.s32.totalorder %s23, %s26
      %p32 = scmp.eq.s32.totalorder %s13, 0
      %p33 = por %p31, %p32
      %p34 = scmp.ne.s32.totalorder %s23, %s26
      %p35 = scmp.eq.s32.totalorder %s18, 1
      %p36 = por %p34, %p35
      %p37 = scmp.ne.s32.totalorder %s26, %s27
      %p38 = scmp.eq.s32.totalorder %s18, 0
      %p39 = por %p37, %p38
      %p40 = scmp.ne.s32.totalorder %s26, %s27
      %p41 = scmp.eq.s32.totalorder %s19, 1
      %p42 = por %p40, %p41
      %p44 = scmp.ne.s32.totalorder %s27, %s43
      %p45 = scmp.eq.s32.totalorder %s19, 0
      %p46 = por %p44, %p45
      %s48 = sadd.s32 %s47, 1
      %p51 = scmp.eq.s32.totalorder %s13, 1
      %p52 = scmp.ne.s32.totalorder %s47, %s49
      %p53 = scmp.eq.s32.totalorder %s13, 0
      %p54 = por %p52, %p53
      %p55 = scmp.ne.s32.totalorder %s47, %s49
      %p56 = scmp.eq.s32.totalorder %s18, 1
      %p57 = por %p55, %p56
      %p58 = scmp.ne.s32.totalorder %s49, %s50
      %p59 = scmp.eq.s32.totalorder %s18, 0
      %p60 = por %p58, %p59
      %p61 = scmp.ne.s32.totalorder %s49, %s50
      %p62 = scmp.eq.s32.totalorder %s19, 1
      %p63 = por %p61, %p62
      %p65 = scmp.ne.s32.totalorder %s50, %s64
      %p66 = scmp.eq.s32.totalorder %s19, 0
      %p67 = por %p65, %p66
      %s69 = sadd.s32 %s68, 1
      %p72 = scmp.eq.s32.totalorder %s13, 1
      %p73 = scmp.ne.s32.totalorder %s68, %s70
      %p74 = scmp.eq.s32.totalorder %s13, 0
      %p75 = por %p73, %p74
      %p76 = scmp.ne.s32.totalorder %s68, %s70
      %p77 = scmp.eq.s32.totalorder %s18, 1
      %p78 = por %p76, %p77
      %p79 = scmp.ne.s32.totalorder %s70, %s71
      %p80 = scmp.eq.s32.totalorder %s18, 0
      %p81 = por %p79, %p80
      %p82 = scmp.ne.s32.totalorder %s70, %s71
      %p83 = scmp.eq.s32.totalorder %s19, 1
      %p84 = por %p82, %p83
      %p86 = scmp.ne.s32.totalorder %s71, %s85
      %p87 = scmp.eq.s32.totalorder %s19, 0
      %p88 = por %p86, %p87
      %s90 = sadd.s32 %s89, 1
      %p93 = scmp.eq.s32.totalorder %s13, 1
      %p94 = scmp.ne.s32.totalorder %s89, %s91
      %p95 = scmp.eq.s32.totalorder %s13, 0
      %p96 = por %p94, %p95
      %p97 = scmp.ne.s32.totalorder %s89, %s91
      %p98 = scmp.eq.s32.totalorder %s18, 1
      %p99 = por %p97, %p98
      %p100 = scmp.ne.s32.totalorder %s91, %s92
      %p101 = scmp.eq.s32.totalorder %s18, 0
      %p102 = por %p100, %p101
      %p103 = scmp.ne.s32.totalorder %s91, %s92
      %p104 = scmp.eq.s32.totalorder %s19, 1
      %p105 = por %p103, %p104
      %p107 = scmp.ne.s32.totalorder %s92, %s106
      %p108 = scmp.eq.s32.totalorder %s19, 0
      %p109 = por %p107, %p108
      %s110 = ssub.s32 %s13, %s20
      %p111 = scmp.eq.s32.totalorder %s110, 0
      %s113 = sadd.s32 %s112, 1
      %s114 = scalar_select %p111, %s112, %s113
      %p117 = pneg %p111
      %p118 = scmp.eq.s32.totalorder %s13, 1
      %p119 = por %p117, %p118
      %p120 = scmp.ne.s32.totalorder %s112, %s115
      %p121 = scmp.eq.s32.totalorder %s13, 0
      %p122 = por %p120, %p121
      %p123 = scmp.ne.s32.totalorder %s112, %s115
      %p124 = scmp.eq.s32.totalorder %s18, 1
      %p125 = por %p123, %p124
      %p126 = scmp.ne.s32.totalorder %s115, %s116
      %p127 = scmp.eq.s32.totalorder %s18, 0
      %p128 = por %p126, %p127
      %p129 = scmp.ne.s32.totalorder %s115, %s116
      %p130 = scmp.eq.s32.totalorder %s19, 1
      %p131 = por %p129, %p130
      %p133 = scmp.ne.s32.totalorder %s116, %s132
      %p134 = scmp.eq.s32.totalorder %s19, 0
      %p135 = por %p133, %p134
      %p136 = scmp.le.s32.totalorder 1, %s13
      %p137 = scmp.lt.s32.totalorder %s13, 3
      %p138 = pnand %p136, %p137
      %p139 = pneg %p138
      // Predicated region
      $region9: #{tpu_custom_call.1} parent=5 // pred_check
        _
      $region10: #{tpu_custom_call.1} parent=5 // pred_check_branch
        %141 = sbr.rel (%p138) target = $region12
      $region11: #{tpu_custom_call.1} parent=5 // pred_region
        %s142 = ssub.s32 %s13, 1
        // Predicated region
        $region13: #{tpu_custom_call.1} parent=11 // pred_check
          %p143 = pneg %p60
        $region14: #{tpu_custom_call.1} parent=11 // pred_check_branch
          %145 = sbr.rel (%p143) target = $region16
        $region15: #{tpu_custom_call.1} parent=11 // pred_region
          _
        $region16: #{tpu_custom_call.1} parent=11 // pred_fallthru
          _
        // Predicated region
        $region17: #{tpu_custom_call.1} parent=11 // pred_check
          %p146 = pneg %p81
        $region18: #{tpu_custom_call.1} parent=11 // pred_check_branch
          %148 = sbr.rel (%p146) target = $region20
        $region19: #{tpu_custom_call.1} parent=11 // pred_region
          _
        $region20: #{tpu_custom_call.1} parent=11 // pred_fallthru
          _
        // Predicated region
        $region21: #{tpu_custom_call.1} parent=11 // pred_check
          %p149 = pneg %p102
        $region22: #{tpu_custom_call.1} parent=11 // pred_check_branch
          %151 = sbr.rel (%p149) target = $region24
        $region23: #{tpu_custom_call.1} parent=11 // pred_region
          _
        $region24: #{tpu_custom_call.1} parent=11 // pred_fallthru
          _
      $region12: #{tpu_custom_call.1} parent=5 // pred_fallthru
        _
      %p152 = scmp.lt.s32.totalorder %s13, 2
      // Predicated region
      $region25: #{tpu_custom_call.1} parent=5 // pred_check
        %p153 = pneg %p152
      $region26: #{tpu_custom_call.1} parent=5 // pred_check_branch
        %155 = sbr.rel (%p153) target = $region28
      $region27: #{tpu_custom_call.1} parent=5 // pred_region
        // Predicated region
        $region29: #{tpu_custom_call.1} parent=27 // pred_check
          %p156 = pneg %p33
        $region30: #{tpu_custom_call.1} parent=27 // pred_check_branch
          %158 = sbr.rel (%p156) target = $region32
        $region31: #{tpu_custom_call.1} parent=27 // pred_region
          %p159 = scmp.lt.s32.totalorder %s13, 1
          %s160 = scalar_select %p159, %s13, 1
          %s161 = smul.addr %s160, 6
          %s162 = smul.addr %s161, 4
          %s163 = scalar_lea.vmem %s0, %s162
        $region32: #{tpu_custom_call.1} parent=27 // pred_fallthru
          _
      $region28: #{tpu_custom_call.1} parent=5 // pred_fallthru
        _
      %p164 = scmp.le.s32.totalorder 1, %s13
      %p165 = scmp.lt.s32.totalorder %s13, 3
      %p166 = pnand %p164, %p165
      %p167 = pneg %p166
      // Predicated region
      $region33: #{tpu_custom_call.1} parent=5 // pred_check
        _
      $region34: #{tpu_custom_call.1} parent=5 // pred_check_branch
        %169 = sbr.rel (%p166) target = $region36
      $region35: #{tpu_custom_call.1} parent=5 // pred_region
        %s170 = ssub.s32 %s13, 1
        %p171 = scmp.lt.s32.totalorder %s18, 1
        %s172 = scalar_select %p171, %s18, 1
        %s173 = smul.addr %s172, 6
        %s174 = smul.addr %s173, 4
        %s175 = scalar_lea.vmem %s0, %s174
        %p176 = pneg %p39
        %p177 = pneg %p36
        %p178 = pneg %p60
        %p179 = pneg %p57
        %p180 = pneg %p81
        %p181 = pneg %p78
        %p182 = pneg %p102
        %p183 = pneg %p99
        %p184 = pneg %p128
        %p185 = pneg %p125
        %s186 = sand.u32 %s115, 1
        %s187 = scalar_lea.sflag [#allocation3], %s186
        %s188 = sand.u32 %s115, 1
        %s189 = smul.addr %s188, 16
        %s190 = scalar_lea.vmem [#allocation2], %s189
        %p191 = scmp.lt.s32.totalorder %s18, 1
        %s192 = scalar_select %p191, %s18, 1
        %s193 = smul.addr %s192, 6
        %s194 = smul.addr %s193, 4
        %s195 = scalar_lea.vmem %s0, %s194
        %v197 = vld [vmem:[%s195] sm:$0xf]
        %v198 = vld [vmem:[%s195 + $0x8] sm:$0xf]
        %v199 = vld [vmem:[%s195 + $0x10] sm:$0x1]
        %v200 = vld [vmem:[%s195] sm:$0xff]
        %v201 = vld [vmem:[%s195 + $0x8] sm:$0x11]
        %v202 = vld [vmem:[%s1] sm:$0xf]
        %v203 = vld [vmem:[%s1 + $0x4] sm:$0xf]
        %v204 = vld [vmem:[%s2] sm:$0xf]
        %v205 = vld [vmem:[%s2 + $0x4] sm:$0xf]
        %v208 = vunpack.c.l.b16 %v204
        %v209 = vunpack.c.l.b16 %v205
        %v210 = vpack.c.b16 %v209, %v208
        %v213 = vunpack.c.l.b16 %v200
        %v214 = vunpack.c.h.b16 %v200
        %v215 = vunpack.c.l.b16 %v201
        %v216 = vunpack.c.h.b16 %v201
        %v217 = vpack.c.b16 %v215, %v213
        %v218 = vpack.c.b16 %v216, %v214
        %219 = vrot.lane.b32.xlu0 %v217, 120
        %v220 = vpop.permute.xlu0 %219
        %221 = vrot.lane.b32.xlu0 %v218, 120
        %v222 = vpop.permute.xlu0 %221
        %vm223 = vcmask 982016
        %v224 = vsel %vm223, %v220, %v222
        %vm225 = vcmask 72704
        %v227 = vsel %vm225, %v210, 0
        %vm229 = vcmask 1043456
        %vm230 = vcmask 1044480
        %v231 = vsel %vm229, 4294967295, 65535
        %v232 = vsel %vm230, %v231, 0
        %v234 = vand.u32 %v224, %v232
        %236 = vmatpush.bf16.msra.mxu0 0
        %237 = vmatpush.bf16.msra.mxu0 0
        %238 = vmatpush.bf16.msra.mxu0 0
        %239 = vmatpush.bf16.msra.mxu0 0
        %240 = vmatpush.bf16.msra.mxu0 0
        %241 = vmatpush.bf16.msra.mxu0 0
        %242 = vmatpush.bf16.msra.mxu0 0
        %243 = vmatpush.bf16.msra.mxu0 %v234
        %244 = vmatmul.bf16.gmra.mxu0 %v227
        %v245 = vpop.f32.mrf.mxu0
        %v246 = vadd.f32 0.0, %v245
        %v247 = vpop.f32.mrf.mxu0
        %v248 = vadd.f32 0.0, %v247
        %249 = vdwg.mxu0
        %v252 = vunpack.c.l.b16 %v202
        %v253 = vunpack.c.l.b16 %v203
        %v254 = vpack.c.b16 %v253, %v252
        %v258 = vunpack.c.l.b16 %v197
        %v259 = vunpack.c.l.b16 %v198
        %v260 = vunpack.c.l.b16 %v199
        %v261 = vpack.c.b16 %v259, %v258
        %v262 = vpack.c.b16 %v260, %v260
        %vm264 = vcmask 146432
        %v266 = vsel %vm264, %v254, 0
        %vm268 = vcmask 1040384
        %v270 = vsel %vm268, %v262, 0
        %272 = vmatpush.bf16.msra.mxu0 0
        %273 = vmatpush.bf16.msra.mxu0 0
        %274 = vmatpush.bf16.msra.mxu0 0
        %275 = vmatpush.bf16.msra.mxu0 0
        %276 = vmatpush.bf16.msra.mxu0 0
        %277 = vmatpush.bf16.msra.mxu0 0
        %278 = vmatpush.bf16.msra.mxu0 %v270
        %279 = vmatpush.bf16.msra.mxu0 %v261
        %280 = vmatmul.bf16.gmra.mxu0 %v266
        %v281 = vpop.f32.mrf.mxu0
        %v282 = vadd.f32 %v246, %v281
        %v283 = vpop.f32.mrf.mxu0
        %v284 = vadd.f32 %v248, %v283
        %285 = vdwg.mxu0
        %v286 = vld [vmem:[%s3] sm:$0xff]
        %v287 = vld [vmem:[%s3 + $0x8] sm:$0xff]
        %289 = vset.pattern.permute.xlu0 0
        %290 = vperm.xlu0 %289, %v286
        %v291 = vpop.permute.xlu0 %290
        %294 = vset.pattern.permute.xlu0 0
        %295 = vperm.xlu0 %294, %v287
        %v296 = vpop.permute.xlu0 %295
        %v298 = vadd.f32 %v282, %v291
        %v299 = vadd.f32 %v284, %v296
        %v300 = vmax.f32 %v298, 0.0
        %v301 = vmax.f32 %v299, 0.0
        %302 = vst [vmem:[%s190] sm:$0xff] %v300
        %303 = vst [vmem:[%s190 + $0x8] sm:$0xff] %v301
        %s304 = sand.u32 %s115, 1
        %s305 = scalar_lea.sflag [#allocation3], %s304
        %s306 = sand.u32 %s115, 1
        %s307 = smul.addr %s306, 16
        %s308 = scalar_lea.vmem [#allocation2], %s307
        // Predicated region
        $region37: #{tpu_custom_call.1} parent=35 // pred_check
          %p309 = pneg %p125
        $region38: #{tpu_custom_call.1} parent=35 // pred_check_branch
          %311 = sbr.rel (%p309) target = $region40
        $region39: #{tpu_custom_call.1} parent=35 // pred_region
          %313 = vsyncadd %s305, 0
          %s314 = smul.addr %s18, 2
          %s315 = smul.addr %s314, 8
          %s316 = scalar_lea.hbm %s4, %s315
          %s317 = sshll.u32 %s308, 4
          %s318 = int_to_ptr.vmem [resolvable:$true] %s317
          %s319 = sshll.u32 %s316, 4
          %s320 = int_to_ptr.hbm [resolvable:$true] %s319
          %325 = dma.vmem_to_hbm [thread:$0]  %s318, 256, %s320, %s305, 128, 128, 8
        $region40: #{tpu_custom_call.1} parent=35 // pred_fallthru
          _
      $region36: #{tpu_custom_call.1} parent=5 // pred_fallthru
        _
      %p326 = scmp.le.s32.totalorder 2, %s13
      // Predicated region
      $region41: #{tpu_custom_call.1} parent=5 // pred_check
        %p327 = pneg %p326
      $region42: #{tpu_custom_call.1} parent=5 // pred_check_branch
        %329 = sbr.rel (%p327) target = $region44
      $region43: #{tpu_custom_call.1} parent=5 // pred_region
        %s330 = ssub.s32 %s13, 2
        // Predicated region
        $region45: #{tpu_custom_call.1} parent=43 // pred_check
          %p331 = pneg %p131
        $region46: #{tpu_custom_call.1} parent=43 // pred_check_branch
          %333 = sbr.rel (%p331) target = $region48
        $region47: #{tpu_custom_call.1} parent=43 // pred_region
          %s334 = sand.u32 %s116, 1
          %s335 = scalar_lea.sflag [#allocation3], %s334
          %s336 = sand.u32 %s116, 1
          %s337 = smul.addr %s336, 16
          %s338 = scalar_lea.vmem [#allocation2], %s337
          %340 = dma.done %s335, 256
        $region48: #{tpu_custom_call.1} parent=43 // pred_fallthru
          _
      $region44: #{tpu_custom_call.1} parent=5 // pred_fallthru
        _
    $region6: #{tpu_custom_call.1} parent=1 // loop_footer
      %s17 = sadd.s32 1, %s13
    $region7: #{tpu_custom_call.1} parent=1 // loop_footer_branch
      %12 = sbr.rel target = $region3
    $region8: #{tpu_custom_call.1} parent=1 // loop_exit
      _
    %341 = vsyncpa [#allocation3], 1
    %s342 = scalar_lea.sflag [#allocation3], 1
    %343 = vsyncpa %s342, 1

</llo_original>
